<compile_context>
chip_gen: v6e
topology: v6e:2x2x1
jax: 0.10.0
libtpu: 0.0.40
codegen_flags: <defaults>
</compile_context>

<pallas_src>
import functools

import jax
import jax.numpy as jnp
from jax import lax
from jax.experimental import pallas as pl
from jax.experimental.pallas import tpu as pltpu

LANES = 128
SUBLANES = 8
MAX_BLOCK_BYTES = 4 * 1024 * 1024   # per-input per-step block (x2 inputs x2 buffers = 16 MiB VMEM)
WIDE_ACC_ROWS = 64                  # 8 vregs of independent accumulation chains


def _round_up(a, b):
    return -(-a // b) * b


def _charbonnier_kernel(x_ref, y_ref, out_ref, *, eps, tile_rows, acc_rows,
                        rows_full, rem, need_mask):
    # Upcast per-tile: HBM traffic stays at the input's native width; the cast
    # is VPU work hidden under the memory bound.
    x = x_ref[...].astype(jnp.float32)
    y = y_ref[...].astype(jnp.float32)
    d = x - y
    val = jnp.sqrt(d * d + jnp.float32(eps * eps))

    if need_mask:
        # Ragged tail handled in-kernel (no wrapper-side full-array pad copy):
        #  - rows >= rows_full(+1) are out-of-bounds partial-block rows (garbage
        #    reads from the clipped DMA) and must contribute 0;
        #  - if rem != 0, row `rows_full` is only valid for lanes < rem (the
        #    remaining lanes are the <128-element structural zero pad).
        row0 = pl.program_id(0) * tile_rows
        row_ids = row0 + lax.broadcasted_iota(jnp.int32, (tile_rows, LANES), 0)
        valid = row_ids < rows_full
        if rem:
            lane_ids = lax.broadcasted_iota(jnp.int32, (tile_rows, LANES), 1)
            valid = valid | ((row_ids == rows_full) & (lane_ids < rem))
        val = jnp.where(valid, val, jnp.float32(0.0))

    # Fold rows into a wide (acc_rows, 128) per-block partial: pure cross-vreg
    # VPU adds with acc_rows/8 independent chains (no XLU lane reduce, no
    # (1,1) masked store).  The final cross-lane sum happens in the wrapper.
    out_ref[...] = jnp.sum(val.reshape(-1, acc_rows, LANES), axis=0, keepdims=True)


def charbonnier_loss(x, y, eps=1e-3):
    assert x.shape == y.shape, (x.shape, y.shape)
    n_elems = x.size
    eps = float(eps)

    # Flatten row-major (free layout bitcast); keep native dtype.
    xf = jnp.ravel(x)
    yf = jnp.ravel(y)

    rows_full, rem = divmod(n_elems, LANES)
    rows = rows_full + (1 if rem else 0)
    if rem:
        # Structural pad to the next lane multiple only (< 128 elements),
        # decoupled from the tile size; padded lanes are masked in-kernel.
        xf = jnp.pad(xf, (0, LANES - rem))
        yf = jnp.pad(yf, (0, LANES - rem))
    x2d = xf.reshape(rows, LANES)
    y2d = yf.reshape(rows, LANES)

    itemsize = x.dtype.itemsize
    # Keep per-block bytes ~constant across dtypes (8192 rows f32, 16384 bf16).
    cap_rows = max(SUBLANES, (MAX_BLOCK_BYTES // (LANES * itemsize)) // SUBLANES * SUBLANES)
    # Respect packed-sublane granularity for sub-32-bit dtypes.
    sublane_mult = SUBLANES * max(1, 4 // itemsize)
    tile_rows = min(cap_rows, _round_up(rows, sublane_mult))
    num_blocks = -(-rows // tile_rows)
    acc_rows = WIDE_ACC_ROWS if tile_rows % WIDE_ACC_ROWS == 0 else SUBLANES
    need_mask = (rem != 0) or (num_blocks * tile_rows != rows)

    kernel = functools.partial(
        _charbonnier_kernel,
        eps=eps, tile_rows=tile_rows, acc_rows=acc_rows,
        rows_full=rows_full, rem=rem, need_mask=need_mask)

    in_spec = pl.BlockSpec((tile_rows, LANES), lambda i: (i, 0))

    partials = pl.pallas_call(
        kernel,
        out_shape=jax.ShapeDtypeStruct((num_blocks, acc_rows, LANES), jnp.float32),
        grid_spec=pltpu.PrefetchScalarGridSpec(
            num_scalar_prefetch=0,
            grid=(num_blocks,),
            in_specs=[in_spec, in_spec],
            out_specs=pl.BlockSpec((1, acc_rows, LANES), lambda i: (i, 0, 0)),
        ),
        compiler_params=pltpu.CompilerParams(
            # Independent per-block partials -> the axis can be sharded across
            # both TensorCores on megacore parts (v7x); no-op on v5e/v6e.
            dimension_semantics=("parallel",),
        ),
    )(x2d, y2d)

    # Cross-lane / cross-block reduce once, outside the kernel.
    total = jnp.sum(partials)
    return total / n_elems


if __name__ == "__main__":
    key = jax.random.PRNGKey(0)

    def _ref(x, y, eps=1e-3):
        d = x.astype(jnp.float32) - y.astype(jnp.float32)
        return jnp.mean(jnp.sqrt(d * d + jnp.float32(eps * eps)))

    # 1) Canonical NCHW shape from the module's usage (lane-aligned path).
    kx, ky = jax.random.split(key)
    x = jax.random.normal(kx, (2, 4, 16, 16), dtype=jnp.float32)
    y = jax.random.normal(ky, (2, 4, 16, 16), dtype=jnp.float32)
    loss = jax.block_until_ready(charbonnier_loss(x, y, eps=1e-3))
    assert jnp.allclose(loss, _ref(x, y), rtol=1e-5, atol=1e-6), (loss, _ref(x, y))

    # 2) Lane-misaligned element count (exercises the in-kernel tail mask).
    kx2, ky2 = jax.random.split(jax.random.PRNGKey(1))
    x2 = jax.random.normal(kx2, (2, 31, 32), dtype=jnp.float32)   # 1984 elems, rem=64
    y2 = jax.random.normal(ky2, (2, 31, 32), dtype=jnp.float32)
    loss2 = jax.block_until_ready(charbonnier_loss(x2, y2, eps=1e-3))
    assert jnp.allclose(loss2, _ref(x2, y2), rtol=1e-5, atol=1e-6), (loss2, _ref(x2, y2))

    # 3) bf16 inputs (native-dtype streaming, in-kernel upcast).
    x3 = x.astype(jnp.bfloat16)
    y3 = y.astype(jnp.bfloat16)
    loss3 = jax.block_until_ready(charbonnier_loss(x3, y3, eps=1e-3))
    assert jnp.allclose(loss3, _ref(x3, y3), rtol=1e-4, atol=1e-5), (loss3, _ref(x3, y3))

    print("KERNEL_OK")
</pallas_src>

<mosaic_0001>
module attributes {stable_mosaic.version = 11 : i64} {
  func.func @_charbonnier_kernel(%arg0: i32, %arg1: memref<16x128xf32, #tpu.memory_space<vmem>>, %arg2: memref<16x128xf32, #tpu.memory_space<vmem>>, %arg3: memref<1x8x128xf32, #tpu.memory_space<vmem>>) attributes {dimension_semantics = [#tpu.dimension_semantics<parallel>], iteration_bounds = array<i64: 1>, scalar_prefetch = 0 : i64, scratch_operands = 0 : i64, tpu.core_type = #tpu.core_type<tc>, window_params = [{transform_indices = @transform_0, window_bounds = array<i64: 16, 128>}, {transform_indices = @transform_1, window_bounds = array<i64: 16, 128>}, {transform_indices = @transform_2, window_bounds = array<i64: 1, 8, 128>}]} {
    %c0 = arith.constant 0 : index
    %c0_0 = arith.constant 0 : index
    %0 = vector.load %arg1[%c0, %c0_0] : memref<16x128xf32, #tpu.memory_space<vmem>>, vector<16x128xf32>
    %c0_1 = arith.constant 0 : index
    %c0_2 = arith.constant 0 : index
    %1 = vector.load %arg2[%c0_1, %c0_2] : memref<16x128xf32, #tpu.memory_space<vmem>>, vector<16x128xf32>
    %2 = arith.subf %0, %1 : vector<16x128xf32>
    %3 = arith.mulf %2, %2 : vector<16x128xf32>
    %cst = arith.constant 9.99999997E-7 : f32
    %4 = vector.broadcast %cst : f32 to vector<16x128xf32>
    %5 = arith.addf %3, %4 : vector<16x128xf32>
    %6 = math.sqrt %5 : vector<16x128xf32>
    %7 = vector.shape_cast %6 : vector<16x128xf32> to vector<2x8x128xf32>
    %cst_3 = arith.constant dense<0.000000e+00> : vector<8x128xf32>
    %8 = vector.multi_reduction <add>, %7, %cst_3 [0] : vector<2x8x128xf32> to vector<8x128xf32>
    %9 = vector.shape_cast %8 : vector<8x128xf32> to vector<1x8x128xf32>
    %c0_4 = arith.constant 0 : index
    %c0_5 = arith.constant 0 : index
    %c0_6 = arith.constant 0 : index
    %10 = vector.load %arg3[%c0_4, %c0_5, %c0_6] : memref<1x8x128xf32, #tpu.memory_space<vmem>>, vector<1x8x128xf32>
    tpu.vector_store %arg3[%c0_4, %c0_5, %c0_6], %9 {strides = array<i32>} : memref<1x8x128xf32, #tpu.memory_space<vmem>>, vector<1x8x128xf32>,
    return
  }
  func.func @transform_0(%arg0: i32) -> (i32, i32) {
    %c0_i32 = arith.constant 0 : i32
    %c0_i32_0 = arith.constant 0 : i32
    return %arg0, %c0_i32 : i32, i32
  }
  func.func @transform_1(%arg0: i32) -> (i32, i32) {
    %c0_i32 = arith.constant 0 : i32
    %c0_i32_0 = arith.constant 0 : i32
    return %arg0, %c0_i32 : i32, i32
  }
  func.func @transform_2(%arg0: i32) -> (i32, i32, i32) {
    %c0_i32 = arith.constant 0 : i32
    %c0_i32_0 = arith.constant 0 : i32
    %c0_i32_1 = arith.constant 0 : i32
    return %arg0, %c0_i32, %c0_i32_0 : i32, i32, i32
  }
}

</mosaic_0001>

<llo_original>
// kernel: tpu_custom_call.1
$region0: #{tpu_custom_call.1}
  #allocation0 [shape = 'u32[]', space=smem, size = 0x4, offset = 0x4, fixed_abs, tag = 'smem constant byte address 0x4 - core index']
  #allocation1 [shape = 'u32[144,128]{1,0:T(1,128)}', space=vmem, size = 0x12000, scoped, tag = 'internal scratch']
  %s0 = inlined_call_operand.hbm [shape: f32[16,128], index: 0, kind: input, shape index: {}]
  %s1 = inlined_call_operand.hbm [shape: f32[16,128], index: 1, kind: input, shape index: {}]
  %s2 = inlined_call_operand.hbm [shape: f32[1,8,128], index: 2, kind: output, shape index: {}]
  %s3 = sld [smem:[#allocation0]]
  $region26: #{tpu_custom_call.1} parent=0
    _
  %s5 = ssub.s32 1, %s3
  %s6 = scalar_select 0, %s5, %s3
  $region1: #{tpu_custom_call.1} parent=0
    #allocation2 [shape = 'u8[8192]{0}', space=vmem, size = 0x2000, scoped, tag = 'input window, operand 0, single buffered']
    #allocation3 [shape = 's32[1]{0}', space=sflag, size = 0x4, scoped, tag = 'scoped memory for tpu_custom_call.1']
    #allocation4 [shape = 's32[1]{0}', space=sflag, size = 0x4, scoped, tag = 'scoped memory for tpu_custom_call.1']
    #allocation5 [shape = 'u8[8192]{0}', space=vmem, size = 0x2000, scoped, tag = 'input window, operand 1, single buffered']
    #allocation6 [shape = 's32[1]{0}', space=sflag, size = 0x4, scoped, tag = 'scoped memory for tpu_custom_call.1']
    #allocation7 [shape = 'u8[4096]{0}', space=vmem, size = 0x1000, scoped, tag = 'output window, operand 0, single buffered']
    %7 = vsyncpa [#allocation3], 0
    %8 = vsyncpa [#allocation6], 0
    %9 = vsyncpa [#allocation4], 0
    // Predicated region
    $region2: #{tpu_custom_call.1} parent=1 // pred_check
      _
    $region3: #{tpu_custom_call.1} parent=1 // pred_check_branch
      %11 = sbr.rel (0) target = $region5
    $region4: #{tpu_custom_call.1} parent=1 // pred_region
      %s13 = ssub.s32 256, 256
      %14 = vsyncadd [#allocation3], %s13
      %s15 = sshll.u32 [#allocation2], 4
      %s16 = int_to_ptr.vmem [resolvable:$true] %s15
      %21 = dma.hbm_to_vmem [thread:$0]  %s0, 256, %s16, [#allocation3], 128, 128, 8
    $region5: #{tpu_custom_call.1} parent=1 // pred_fallthru
      _
    // Predicated region
    $region6: #{tpu_custom_call.1} parent=1 // pred_check
      _
    $region7: #{tpu_custom_call.1} parent=1 // pred_check_branch
      %23 = sbr.rel (0) target = $region9
    $region8: #{tpu_custom_call.1} parent=1 // pred_region
      %s25 = ssub.s32 256, 256
      %26 = vsyncadd [#allocation6], %s25
      %s27 = sshll.u32 [#allocation5], 4
      %s28 = int_to_ptr.vmem [resolvable:$true] %s27
      %33 = dma.hbm_to_vmem [thread:$0]  %s1, 256, %s28, [#allocation6], 128, 128, 8
    $region9: #{tpu_custom_call.1} parent=1 // pred_fallthru
      _
    // Predicated region
    $region10: #{tpu_custom_call.1} parent=1 // pred_check
      _
    $region11: #{tpu_custom_call.1} parent=1 // pred_check_branch
      %35 = sbr.rel (0) target = $region13
    $region12: #{tpu_custom_call.1} parent=1 // pred_region
      %36 = dma.done [#allocation3], 256
    $region13: #{tpu_custom_call.1} parent=1 // pred_fallthru
      _
    // Predicated region
    $region14: #{tpu_custom_call.1} parent=1 // pred_check
      _
    $region15: #{tpu_custom_call.1} parent=1 // pred_check_branch
      %38 = sbr.rel (0) target = $region17
    $region16: #{tpu_custom_call.1} parent=1 // pred_region
      %39 = dma.done [#allocation6], 256
    $region17: #{tpu_custom_call.1} parent=1 // pred_fallthru
      _
    %v40 = vld [vmem:[#allocation2] sm:$0xff]
    %v41 = vld [vmem:[#allocation2 + $0x8] sm:$0xff]
    %v42 = vld [vmem:[#allocation5] sm:$0xff]
    %v43 = vld [vmem:[#allocation5 + $0x8] sm:$0xff]
    %v44 = vsub.f32 %v40, %v42
    %v45 = vsub.f32 %v41, %v43
    %v46 = vmul.f32 %v44, %v44
    %v47 = vmul.f32 %v45, %v45
    %v48 = vadd.f32 %v46, 1e-06
    %v49 = vadd.f32 %v47, 1e-06
    %v50 = vrsqrt.pop %v48
    %v51 = vmul.f32 %v48, %v50
    %vm52 = vcmp.eq.f32.partialorder %v48, inf
    %v53 = vsel %vm52, %v48, %v51
    %vm54 = vcmp.eq.f32.partialorder %v48, 0.0
    %v55 = vand.u32 %v48, 2147483648
    %v56 = vsel %vm54, %v55, %v53
    %v57 = vrsqrt.pop %v49
    %v58 = vmul.f32 %v49, %v57
    %vm59 = vcmp.eq.f32.partialorder %v49, inf
    %v60 = vsel %vm59, %v49, %v58
    %vm61 = vcmp.eq.f32.partialorder %v49, 0.0
    %v62 = vand.u32 %v49, 2147483648
    %v63 = vsel %vm61, %v62, %v60
    %v64 = vadd.f32 %v56, %v63
    %65 = vst [vmem:[#allocation7] sm:$0xff] %v64
    // Predicated region
    $region18: #{tpu_custom_call.1} parent=1 // pred_check
      _
    $region19: #{tpu_custom_call.1} parent=1 // pred_check_branch
      %67 = sbr.rel (0) target = $region21
    $region20: #{tpu_custom_call.1} parent=1 // pred_region
      %s69 = ssub.s32 128, 128
      %70 = vsyncadd [#allocation4], %s69
      %s72 = sshll.u32 [#allocation7], 4
      %s73 = int_to_ptr.vmem [resolvable:$true] %s72
      %75 = dma.vmem_to_hbm [thread:$0]  %s73, 128, %s2, [#allocation4]
    $region21: #{tpu_custom_call.1} parent=1 // pred_fallthru
      _
    // Predicated region
    $region22: #{tpu_custom_call.1} parent=1 // pred_check
      _
    $region23: #{tpu_custom_call.1} parent=1 // pred_check_branch
      %77 = sbr.rel (0) target = $region25
    $region24: #{tpu_custom_call.1} parent=1 // pred_region
      %78 = dma.done [#allocation4], 128
    $region25: #{tpu_custom_call.1} parent=1 // pred_fallthru
      _
    %79 = vsyncpa [#allocation3], 1
    %80 = vsyncpa [#allocation6], 1
    %81 = vsyncpa [#allocation4], 1

</llo_original>
